<compile_context>
chip_gen: v7x
topology: tpu7x:2x2x1
jax: 0.10.0
libtpu: 0.0.40
codegen_flags: <defaults>
</compile_context>

<pallas_src>
import jax
import jax.numpy as jnp
from jax.experimental import pallas as pl
from jax.experimental.pallas import tpu as pltpu


_TILE_BYTES_TARGET = 2 * 1024 * 1024   # per-input, per-buffer VMEM tile target
_MIN_STEPS = 4                         # min inner-grid depth per part


def _cdiv(a, b):
    return -(-a // b)


def _round_up(x, m):
    return _cdiv(x, m) * m


def _num_tensorcore_parts():
    """2 on chips with two TensorCores per device (v4 / v5p / v7x), else 1."""
    try:
        kind = jax.devices()[0].device_kind.lower()
    except Exception:
        return 1
    if any(tag in kind for tag in ("v4", "v5p", "v7")):
        return 2
    return 1


def _make_kernel(tile, tiles_per_part, extent, needs_mask, dense, binary_target):
    def kernel(pred_ref, target_ref, inter_ref, pt_ref, bce_ref):
        k = pl.program_id(1)

        @pl.when(k == 0)
        def _init():
            inter_ref[...] = jnp.zeros_like(inter_ref)
            pt_ref[...] = jnp.zeros_like(pt_ref)
            bce_ref[...] = jnp.zeros_like(bce_ref)

        p = pred_ref[...].astype(jnp.float32)
        t = target_ref[...].astype(jnp.float32)

        if needs_mask:
            # Ragged / overshoot tiles: zero out-of-range positions on BOTH
            # inputs (select, not multiply) so garbage/NaN cannot reach the
            # logs or the sums.  p=0, t=0 contributes exactly 0 everywhere.
            gtile = pl.program_id(0) * tiles_per_part + k
            idx = gtile * tile + jax.lax.broadcasted_iota(jnp.int32, p.shape, 1)
            valid = idx < extent
            p = jnp.where(valid, p, 0.0)
            t = jnp.where(valid, t, 0.0)

        if binary_target:
            # Exact for t in {0, 1}; halves EUP log traffic.
            bce_elem = -jnp.maximum(jnp.log(jnp.where(t > 0.5, p, 1.0 - p)), -100.0)
        else:
            # nn.BCELoss with PyTorch's log clamp at -100:
            #   -(t*log(p) + (1-t)*log(1-p)) == -(log(1-p) + t*(log(p)-log(1-p)))
            log_p = jnp.maximum(jnp.log(p), -100.0)
            log_1mp = jnp.maximum(jnp.log(1.0 - p), -100.0)
            bce_elem = -(log_1mp + t * (log_p - log_1mp))

        if dense:
            # (B, tile_rows, 128) tile: reduce only the sublane axis here;
            # the 128-lane reduce of the resident partials runs in the wrapper.
            inter_ref[...] += jnp.sum(p * t, axis=1)[None]
            pt_ref[...] += jnp.sum(p + t, axis=1)[None]
            bce_ref[...] += jnp.sum(bce_elem, axis=1)[None]
        else:
            # (B, tile_d) fallback: full per-row lane reduce each step.
            inter_ref[...] += jnp.sum(p * t, axis=1, keepdims=True)[None]
            pt_ref[...] += jnp.sum(p + t, axis=1, keepdims=True)[None]
            bce_ref[...] += jnp.sum(bce_elem, axis=1, keepdims=True)[None]

    return kernel


def structure_loss(pred, target, *, binary_target=False):
    """pred, target: (B, ...); pred is a probability map in (0, 1).

    Returns scalar (DiceLoss + BCELoss) / 2, matching the PyTorch module.
    Set binary_target=True only when target is exactly {0, 1} (single-log BCE).
    """
    # TODO(synk): optional per-element BCELoss `weight` (module arg, default
    # None) is not implemented; only the unweighted path is supported.
    B = pred.shape[0]
    D = 1
    for s in pred.shape[1:]:
        D *= s

    pred_flat = pred.reshape(B, D)
    target_flat = target.reshape(B, D)
    itemsize = max(jnp.dtype(pred.dtype).itemsize, jnp.dtype(target.dtype).itemsize)
    num_parts = _num_tensorcore_parts()

    dense = (D % 128 == 0) and D >= 128
    if dense:
        # Sublane/lane-dense view (free, contiguous reshape): (B, R, 128).
        R = D // 128
        a = pred_flat.reshape(B, R, 128)
        b = target_flat.reshape(B, R, 128)
        extent = R
        cap = max(8, (_TILE_BYTES_TARGET // max(B * 128 * itemsize, 1)) // 8 * 8)
        tile = min(cap, _round_up(_cdiv(R, num_parts * _MIN_STEPS), 8))
        if tile >= R:
            tile = R                      # full-dim block (always legal)
        n_tiles = _cdiv(R, tile)
    else:
        # Lane-tiled fallback for D % 128 != 0; ragged tail masked in-kernel.
        a, b = pred_flat, target_flat
        extent = D
        padded_rows = _round_up(B, 8)     # account for sublane padding in VMEM
        cap = max(128,
                  (_TILE_BYTES_TARGET // max(padded_rows * itemsize, 1)) // 128 * 128)
        tile = min(cap, _round_up(_cdiv(D, num_parts * _MIN_STEPS), 128))
        if tile >= D:
            tile = D                      # full-dim block (always legal)
        n_tiles = _cdiv(D, tile)

    num_parts = min(num_parts, n_tiles)
    tiles_per_part = _cdiv(n_tiles, num_parts)
    covered = num_parts * tiles_per_part * tile
    needs_mask = covered != extent
    overshoot = num_parts * tiles_per_part > n_tiles

    def tile_index(pi, k):
        g = pi * tiles_per_part + k
        if overshoot:
            # Overshoot steps re-read the last valid tile; the in-kernel mask
            # (computed from the *unclamped* index) zeroes their contribution.
            g = jnp.minimum(g, n_tiles - 1)
        return g

    if dense:
        in_spec = pl.BlockSpec((B, tile, 128),
                               lambda pi, k: (0, tile_index(pi, k), 0))
        part_shape = jax.ShapeDtypeStruct((num_parts, B, 128), jnp.float32)
        out_spec = pl.BlockSpec((1, B, 128), lambda pi, k: (pi, 0, 0))
    else:
        in_spec = pl.BlockSpec((B, tile),
                               lambda pi, k: (0, tile_index(pi, k)))
        part_shape = jax.ShapeDtypeStruct((num_parts, B, 1), jnp.float32)
        out_spec = pl.BlockSpec((1, B, 1), lambda pi, k: (pi, 0, 0))

    kernel = _make_kernel(tile, tiles_per_part, extent, needs_mask, dense,
                          binary_target)

    n_elem = B * D
    cost = pl.CostEstimate(
        flops=16 * n_elem,
        transcendentals=(1 if binary_target else 2) * n_elem,
        bytes_accessed=2 * n_elem * itemsize + 3 * num_parts * B * 128 * 4,
    )

    inter_p, pt_p, bce_p = pl.pallas_call(
        kernel,
        out_shape=(part_shape, part_shape, part_shape),
        grid_spec=pltpu.PrefetchScalarGridSpec(
            num_scalar_prefetch=0,
            grid=(num_parts, tiles_per_part),
            in_specs=[in_spec, in_spec],
            out_specs=[out_spec, out_spec, out_spec],
        ),
        compiler_params=pltpu.CompilerParams(
            dimension_semantics=("parallel", "arbitrary")),
        cost_estimate=cost,
    )(a, b)

    # Tiny final combine of (num_parts, B, 128 or 1) partials (plain XLA).
    inter = jnp.sum(inter_p, axis=(0, 2))          # (B,)
    pt = jnp.sum(pt_p, axis=(0, 2))                # (B,)
    bce_loss = jnp.sum(bce_p) / (B * D)            # true element count

    smooth = 1.0
    dice_score = (2.0 * inter + smooth) / (pt + smooth)
    dice_loss = 1.0 - jnp.sum(dice_score) / B
    return (dice_loss + bce_loss) * 0.5


def _structure_loss_ref(pred, target):
    # Pure-JAX reference mirroring the PyTorch module.
    B = pred.shape[0]
    p = pred.reshape(B, -1).astype(jnp.float32)
    t = target.reshape(B, -1).astype(jnp.float32)
    bce = jnp.mean(-(t * jnp.maximum(jnp.log(p), -100.0)
                     + (1.0 - t) * jnp.maximum(jnp.log(1.0 - p), -100.0)))
    inter = jnp.sum(p * t, axis=1)
    dice_score = (2.0 * inter + 1.0) / (jnp.sum(p, axis=1) + jnp.sum(t, axis=1) + 1.0)
    dice = 1.0 - jnp.sum(dice_score) / B
    return (dice + bce) / 2.0


if __name__ == "__main__":
    key = jax.random.PRNGKey(0)

    cases = [
        (2, 4, 16, 16),    # D = 1024: dense (B, 8, 128) path, single tile
        (2, 3, 10, 10),    # D = 300 : lane-tiled fallback, ragged last tile
        (2, 1, 13, 128),   # D = 1664: dense path with ragged row tiles
    ]

    last = None
    for shape in cases:
        key, k1, k2 = jax.random.split(key, 3)
        # pred must be a probability map (nn.BCELoss expects inputs in (0,1)).
        pred = jax.nn.sigmoid(jax.random.normal(k1, shape, dtype=jnp.float32))
        target = (jax.random.uniform(k2, shape) > 0.5).astype(jnp.float32)
        out = jax.block_until_ready(structure_loss(pred, target))
        ref = _structure_loss_ref(pred, target)
        assert jnp.allclose(out, ref, atol=1e-5, rtol=1e-5), (shape, out, ref)
        last = (pred, target, ref)

    # Single-log fast path (exact for {0,1} targets).
    pred, target, ref = last
    out_b = jax.block_until_ready(structure_loss(pred, target, binary_target=True))
    assert jnp.allclose(out_b, ref, atol=1e-5, rtol=1e-5), (out_b, ref)

    print("KERNEL_OK")
</pallas_src>

<mosaic_0001>
module attributes {stable_mosaic.version = 11 : i64} {
  func.func @kernel(%arg0: i32, %arg1: i32, %arg2: memref<2x8x128xf32, #tpu.memory_space<vmem>>, %arg3: memref<2x8x128xf32, #tpu.memory_space<vmem>>, %arg4: memref<1x2x128xf32, #tpu.memory_space<vmem>>, %arg5: memref<1x2x128xf32, #tpu.memory_space<vmem>>, %arg6: memref<1x2x128xf32, #tpu.memory_space<vmem>>) attributes {dimension_semantics = [#tpu.dimension_semantics<parallel>, #tpu.dimension_semantics<arbitrary>], iteration_bounds = array<i64: 1, 1>, scalar_prefetch = 0 : i64, scratch_operands = 0 : i64, tpu.core_type = #tpu.core_type<tc>, window_params = [{transform_indices = @transform_0, window_bounds = array<i64: 2, 8, 128>}, {transform_indices = @transform_1, window_bounds = array<i64: 2, 8, 128>}, {transform_indices = @transform_2, window_bounds = array<i64: 1, 2, 128>}, {transform_indices = @transform_3, window_bounds = array<i64: 1, 2, 128>}, {transform_indices = @transform_4, window_bounds = array<i64: 1, 2, 128>}]} {
    %c0_i32 = arith.constant 0 : i32
    %0 = arith.cmpi eq, %arg1, %c0_i32 : i32
    %1 = arith.extui %0 : i1 to i32
    %c0_i32_0 = arith.constant 0 : i32
    %2 = arith.cmpi ne, %1, %c0_i32_0 : i32
    scf.if %2 {
      %cst_30 = arith.constant 0.000000e+00 : f32
      %35 = vector.broadcast %cst_30 : f32 to vector<1x2x128xf32>
      %c0_31 = arith.constant 0 : index
      %c0_32 = arith.constant 0 : index
      %c0_33 = arith.constant 0 : index
      %36 = vector.load %arg4[%c0_31, %c0_32, %c0_33] : memref<1x2x128xf32, #tpu.memory_space<vmem>>, vector<1x2x128xf32>
      tpu.vector_store %arg4[%c0_31, %c0_32, %c0_33], %35 {strides = array<i32>} : memref<1x2x128xf32, #tpu.memory_space<vmem>>, vector<1x2x128xf32>,
      %cst_34 = arith.constant 0.000000e+00 : f32
      %37 = vector.broadcast %cst_34 : f32 to vector<1x2x128xf32>
      %c0_35 = arith.constant 0 : index
      %c0_36 = arith.constant 0 : index
      %c0_37 = arith.constant 0 : index
      %38 = vector.load %arg5[%c0_35, %c0_36, %c0_37] : memref<1x2x128xf32, #tpu.memory_space<vmem>>, vector<1x2x128xf32>
      tpu.vector_store %arg5[%c0_35, %c0_36, %c0_37], %37 {strides = array<i32>} : memref<1x2x128xf32, #tpu.memory_space<vmem>>, vector<1x2x128xf32>,
      %cst_38 = arith.constant 0.000000e+00 : f32
      %39 = vector.broadcast %cst_38 : f32 to vector<1x2x128xf32>
      %c0_39 = arith.constant 0 : index
      %c0_40 = arith.constant 0 : index
      %c0_41 = arith.constant 0 : index
      %40 = vector.load %arg6[%c0_39, %c0_40, %c0_41] : memref<1x2x128xf32, #tpu.memory_space<vmem>>, vector<1x2x128xf32>
      tpu.vector_store %arg6[%c0_39, %c0_40, %c0_41], %39 {strides = array<i32>} : memref<1x2x128xf32, #tpu.memory_space<vmem>>, vector<1x2x128xf32>,
    } else {
    }
    %c0 = arith.constant 0 : index
    %c0_1 = arith.constant 0 : index
    %c0_2 = arith.constant 0 : index
    %3 = vector.load %arg2[%c0, %c0_1, %c0_2] : memref<2x8x128xf32, #tpu.memory_space<vmem>>, vector<2x8x128xf32>
    %c0_3 = arith.constant 0 : index
    %c0_4 = arith.constant 0 : index
    %c0_5 = arith.constant 0 : index
    %4 = vector.load %arg3[%c0_3, %c0_4, %c0_5] : memref<2x8x128xf32, #tpu.memory_space<vmem>>, vector<2x8x128xf32>
    %5 = math.log %3 : vector<2x8x128xf32>
    %cst = arith.constant -1.000000e+02 : f32
    %6 = vector.broadcast %cst : f32 to vector<2x8x128xf32>
    %7 = arith.maximumf %5, %6 : vector<2x8x128xf32>
    %cst_6 = arith.constant 1.000000e+00 : f32
    %8 = vector.broadcast %cst_6 : f32 to vector<2x8x128xf32>
    %9 = arith.subf %8, %3 : vector<2x8x128xf32>
    %10 = math.log %9 : vector<2x8x128xf32>
    %cst_7 = arith.constant -1.000000e+02 : f32
    %11 = vector.broadcast %cst_7 : f32 to vector<2x8x128xf32>
    %12 = arith.maximumf %10, %11 : vector<2x8x128xf32>
    %13 = arith.subf %7, %12 : vector<2x8x128xf32>
    %14 = arith.mulf %4, %13 : vector<2x8x128xf32>
    %15 = arith.addf %12, %14 : vector<2x8x128xf32>
    %cst_8 = arith.constant 0.000000e+00 : f32
    %16 = vector.broadcast %cst_8 : f32 to vector<2x8x128xf32>
    %17 = arith.subf %16, %15 : vector<2x8x128xf32>
    %c0_9 = arith.constant 0 : index
    %c0_10 = arith.constant 0 : index
    %c0_11 = arith.constant 0 : index
    %18 = vector.load %arg4[%c0_9, %c0_10, %c0_11] : memref<1x2x128xf32, #tpu.memory_space<vmem>>, vector<1x2x128xf32>
    %19 = arith.mulf %3, %4 : vector<2x8x128xf32>
    %cst_12 = arith.constant dense<0.000000e+00> : vector<2x128xf32>
    %20 = vector.multi_reduction <add>, %19, %cst_12 [1] : vector<2x8x128xf32> to vector<2x128xf32>
    %21 = vector.shape_cast %20 : vector<2x128xf32> to vector<1x2x128xf32>
    %22 = arith.addf %18, %21 : vector<1x2x128xf32>
    %c0_13 = arith.constant 0 : index
    %c0_14 = arith.constant 0 : index
    %c0_15 = arith.constant 0 : index
    %23 = vector.load %arg4[%c0_13, %c0_14, %c0_15] : memref<1x2x128xf32, #tpu.memory_space<vmem>>, vector<1x2x128xf32>
    tpu.vector_store %arg4[%c0_13, %c0_14, %c0_15], %22 {strides = array<i32>} : memref<1x2x128xf32, #tpu.memory_space<vmem>>, vector<1x2x128xf32>,
    %c0_16 = arith.constant 0 : index
    %c0_17 = arith.constant 0 : index
    %c0_18 = arith.constant 0 : index
    %24 = vector.load %arg5[%c0_16, %c0_17, %c0_18] : memref<1x2x128xf32, #tpu.memory_space<vmem>>, vector<1x2x128xf32>
    %25 = arith.addf %3, %4 : vector<2x8x128xf32>
    %cst_19 = arith.constant dense<0.000000e+00> : vector<2x128xf32>
    %26 = vector.multi_reduction <add>, %25, %cst_19 [1] : vector<2x8x128xf32> to vector<2x128xf32>
    %27 = vector.shape_cast %26 : vector<2x128xf32> to vector<1x2x128xf32>
    %28 = arith.addf %24, %27 : vector<1x2x128xf32>
    %c0_20 = arith.constant 0 : index
    %c0_21 = arith.constant 0 : index
    %c0_22 = arith.constant 0 : index
    %29 = vector.load %arg5[%c0_20, %c0_21, %c0_22] : memref<1x2x128xf32, #tpu.memory_space<vmem>>, vector<1x2x128xf32>
    tpu.vector_store %arg5[%c0_20, %c0_21, %c0_22], %28 {strides = array<i32>} : memref<1x2x128xf32, #tpu.memory_space<vmem>>, vector<1x2x128xf32>,
    %c0_23 = arith.constant 0 : index
    %c0_24 = arith.constant 0 : index
    %c0_25 = arith.constant 0 : index
    %30 = vector.load %arg6[%c0_23, %c0_24, %c0_25] : memref<1x2x128xf32, #tpu.memory_space<vmem>>, vector<1x2x128xf32>
    %cst_26 = arith.constant dense<0.000000e+00> : vector<2x128xf32>
    %31 = vector.multi_reduction <add>, %17, %cst_26 [1] : vector<2x8x128xf32> to vector<2x128xf32>
    %32 = vector.shape_cast %31 : vector<2x128xf32> to vector<1x2x128xf32>
    %33 = arith.addf %30, %32 : vector<1x2x128xf32>
    %c0_27 = arith.constant 0 : index
    %c0_28 = arith.constant 0 : index
    %c0_29 = arith.constant 0 : index
    %34 = vector.load %arg6[%c0_27, %c0_28, %c0_29] : memref<1x2x128xf32, #tpu.memory_space<vmem>>, vector<1x2x128xf32>
    tpu.vector_store %arg6[%c0_27, %c0_28, %c0_29], %33 {strides = array<i32>} : memref<1x2x128xf32, #tpu.memory_space<vmem>>, vector<1x2x128xf32>,
    return
  }
  func.func @transform_0(%arg0: i32, %arg1: i32) -> (i32, i32, i32) {
    %c1_i32 = arith.constant 1 : i32
    %0 = arith.muli %arg0, %c1_i32 : i32
    %1 = arith.addi %0, %arg1 : i32
    %c0_i32 = arith.constant 0 : i32
    %c0_i32_0 = arith.constant 0 : i32
    %c0_i32_1 = arith.constant 0 : i32
    return %c0_i32, %1, %c0_i32_0 : i32, i32, i32
  }
  func.func @transform_1(%arg0: i32, %arg1: i32) -> (i32, i32, i32) {
    %c1_i32 = arith.constant 1 : i32
    %0 = arith.muli %arg0, %c1_i32 : i32
    %1 = arith.addi %0, %arg1 : i32
    %c0_i32 = arith.constant 0 : i32
    %c0_i32_0 = arith.constant 0 : i32
    %c0_i32_1 = arith.constant 0 : i32
    return %c0_i32, %1, %c0_i32_0 : i32, i32, i32
  }
  func.func @transform_2(%arg0: i32, %arg1: i32) -> (i32, i32, i32) {
    %c0_i32 = arith.constant 0 : i32
    %c0_i32_0 = arith.constant 0 : i32
    %c0_i32_1 = arith.constant 0 : i32
    return %arg0, %c0_i32, %c0_i32_0 : i32, i32, i32
  }
  func.func @transform_3(%arg0: i32, %arg1: i32) -> (i32, i32, i32) {
    %c0_i32 = arith.constant 0 : i32
    %c0_i32_0 = arith.constant 0 : i32
    %c0_i32_1 = arith.constant 0 : i32
    return %arg0, %c0_i32, %c0_i32_0 : i32, i32, i32
  }
  func.func @transform_4(%arg0: i32, %arg1: i32) -> (i32, i32, i32) {
    %c0_i32 = arith.constant 0 : i32
    %c0_i32_0 = arith.constant 0 : i32
    %c0_i32_1 = arith.constant 0 : i32
    return %arg0, %c0_i32, %c0_i32_0 : i32, i32, i32
  }
}

</mosaic_0001>

<llo_original>
// kernel: tpu_custom_call.1
$region0: #{tpu_custom_call.1}
  #allocation0 [shape = 'u32[]', space=smem, size = 0x4, offset = 0x4, fixed_abs, tag = 'smem constant byte address 0x4 - core index']
  #allocation1 [shape = 'u32[144,128]{1,0:T(1,128)}', space=vmem, size = 0x12000, scoped, tag = 'internal scratch']
  %s0 = inlined_call_operand.hbm [shape: f32[2,8,128], index: 0, kind: input, shape index: {}]
  %s1 = inlined_call_operand.hbm [shape: f32[2,8,128], index: 1, kind: input, shape index: {}]
  %s2 = inlined_call_operand.hbm [shape: f32[1,2,128], index: 2, kind: output, shape index: {0}]
  %s3 = inlined_call_operand.hbm [shape: f32[1,2,128], index: 3, kind: output, shape index: {1}]
  %s4 = inlined_call_operand.hbm [shape: f32[1,2,128], index: 4, kind: output, shape index: {2}]
  %5 = xla_tuple %s2, %s3, %s4
  %s6 = sld [smem:[#allocation0]]
  $region46: #{tpu_custom_call.1} parent=0
    _
  %s8 = ssub.s32 1, %s6
  %s9 = scalar_select 0, %s8, %s6
  $region1: #{tpu_custom_call.1} parent=0
    #allocation2 [shape = 'u8[8192]{0}', space=vmem, size = 0x2000, scoped, tag = 'input window, operand 0, single buffered']
    #allocation3 [shape = 's32[1]{0}', space=sflag, size = 0x4, scoped, tag = 'scoped memory for tpu_custom_call.1']
    #allocation4 [shape = 's32[1]{0}', space=sflag, size = 0x4, scoped, tag = 'scoped memory for tpu_custom_call.1']
    #allocation5 [shape = 'u8[8192]{0}', space=vmem, size = 0x2000, scoped, tag = 'input window, operand 1, single buffered']
    #allocation6 [shape = 's32[1]{0}', space=sflag, size = 0x4, scoped, tag = 'scoped memory for tpu_custom_call.1']
    #allocation7 [shape = 'u8[1024]{0}', space=vmem, size = 0x400, scoped, tag = 'output window, operand 0, single buffered']
    #allocation8 [shape = 'u8[1024]{0}', space=vmem, size = 0x400, scoped, tag = 'output window, operand 1, single buffered']
    #allocation9 [shape = 's32[1]{0}', space=sflag, size = 0x4, scoped, tag = 'scoped memory for tpu_custom_call.1']
    #allocation10 [shape = 'u8[1024]{0}', space=vmem, size = 0x400, scoped, tag = 'output window, operand 2, single buffered']
    %10 = vsyncpa [#allocation3], 0
    %11 = vsyncpa [#allocation6], 0
    %12 = vsyncpa [#allocation4], 0
    %13 = vsyncpa [#allocation9], 0
    // Predicated region
    $region2: #{tpu_custom_call.1} parent=1 // pred_check
      _
    $region3: #{tpu_custom_call.1} parent=1 // pred_check_branch
      %15 = sbr.rel (0) target = $region5
    $region4: #{tpu_custom_call.1} parent=1 // pred_region
      %s16 = sadd.s32 0, 0
      %s18 = ssub.s32 256, 256
      %19 = vsyncadd [#allocation3], %s18
      %s20 = smul.addr %s16, 128
      %s21 = scalar_lea.hbm %s0, %s20
      %s22 = sshll.u32 [#allocation2], 4
      %s23 = int_to_ptr.vmem [resolvable:$true] %s22
      %28 = dma.hbm_to_vmem [thread:$0]  %s21, 256, %s23, [#allocation3], 128, 128, 8
    $region5: #{tpu_custom_call.1} parent=1 // pred_fallthru
      _
    // Predicated region
    $region6: #{tpu_custom_call.1} parent=1 // pred_check
      _
    $region7: #{tpu_custom_call.1} parent=1 // pred_check_branch
      %30 = sbr.rel (0) target = $region9
    $region8: #{tpu_custom_call.1} parent=1 // pred_region
      %s31 = sadd.s32 0, 0
      %s33 = ssub.s32 256, 256
      %34 = vsyncadd [#allocation6], %s33
      %s35 = smul.addr %s31, 128
      %s36 = scalar_lea.hbm %s1, %s35
      %s37 = sshll.u32 [#allocation5], 4
      %s38 = int_to_ptr.vmem [resolvable:$true] %s37
      %43 = dma.hbm_to_vmem [thread:$0]  %s36, 256, %s38, [#allocation6], 128, 128, 8
    $region9: #{tpu_custom_call.1} parent=1 // pred_fallthru
      _
    // Predicated region
    $region10: #{tpu_custom_call.1} parent=1 // pred_check
      _
    $region11: #{tpu_custom_call.1} parent=1 // pred_check_branch
      %45 = sbr.rel (0) target = $region13
    $region12: #{tpu_custom_call.1} parent=1 // pred_region
      %46 = dma.done [#allocation3], 256
    $region13: #{tpu_custom_call.1} parent=1 // pred_fallthru
      _
    // Predicated region
    $region14: #{tpu_custom_call.1} parent=1 // pred_check
      _
    $region15: #{tpu_custom_call.1} parent=1 // pred_check_branch
      %48 = sbr.rel (0) target = $region17
    $region16: #{tpu_custom_call.1} parent=1 // pred_region
      %49 = dma.done [#allocation6], 256
    $region17: #{tpu_custom_call.1} parent=1 // pred_fallthru
      _
    %s50 = sadd.s32 0, 0
    %s51 = sadd.s32 0, 0
    %p52 = scmp.eq.s32.totalorder 0, 0
    // Predicated region
    $region18: #{tpu_custom_call.1} parent=1 // pred_check
      %p53 = pneg %p52
    $region19: #{tpu_custom_call.1} parent=1 // pred_check_branch
      %55 = sbr.rel (%p53) target = $region21
    $region20: #{tpu_custom_call.1} parent=1 // pred_region
      %56 = vst [vmem:[#allocation7] sm:$0x3] 0.0
      %57 = vst [vmem:[#allocation8] sm:$0x3] 0.0
      %58 = vst [vmem:[#allocation10] sm:$0x3] 0.0
    $region21: #{tpu_custom_call.1} parent=1 // pred_fallthru
      _
    %v59 = vld [vmem:[#allocation2] sm:$0xff]
    %v60 = vld [vmem:[#allocation2 + $0x8] sm:$0xff]
    %v61 = vld [vmem:[#allocation5] sm:$0xff]
    %v62 = vld [vmem:[#allocation5 + $0x8] sm:$0xff]
    %v63 = vlog2.pop %v59
    %v64 = vmul.f32 %v63, 0.6931472
    %v65 = vlog2.pop %v60
    %v66 = vmul.f32 %v65, 0.6931472
    %v67 = vmax.f32 %v64, -100.0
    %v68 = vmax.f32 %v66, -100.0
    %v69 = vsub.f32 1.0, %v59
    %v70 = vsub.f32 1.0, %v60
    %v71 = vlog2.pop %v69
    %v72 = vmul.f32 %v71, 0.6931472
    %v73 = vlog2.pop %v70
    %v74 = vmul.f32 %v73, 0.6931472
    %v75 = vmax.f32 %v72, -100.0
    %v76 = vmax.f32 %v74, -100.0
    %v77 = vsub.f32 %v67, %v75
    %v78 = vsub.f32 %v68, %v76
    %v79 = vmul.f32 %v61, %v77
    %v80 = vmul.f32 %v62, %v78
    %v81 = vadd.f32 %v75, %v79
    %v82 = vadd.f32 %v76, %v80
    %v83 = vsub.f32 0.0, %v81
    %v84 = vsub.f32 0.0, %v82
    %v85 = vld [vmem:[#allocation7] sm:$0x3]
    %v86 = vmul.f32 %v59, %v61
    %v87 = vmul.f32 %v60, %v62
    %v88 = vrot.slane %v86, 4
    %v89 = vadd.f32 %v86, %v88
    %v90 = vrot.slane %v89, 2
    %v91 = vadd.f32 %v89, %v90
    %v92 = vrot.slane %v91, 1
    %v93 = vadd.f32 %v91, %v92
    %v94 = vrot.slane %v87, 4
    %v95 = vadd.f32 %v87, %v94
    %v96 = vrot.slane %v95, 2
    %v97 = vadd.f32 %v95, %v96
    %v98 = vrot.slane %v97, 1
    %v99 = vadd.f32 %v97, %v98
    %vm102 = vcmask 1041409
    %v103 = vsel %vm102, %v99, %v93
    %v105 = vadd.f32 %v85, %v103
    %106 = vst [vmem:[#allocation7] sm:$0x3] %v105
    %v107 = vld [vmem:[#allocation8] sm:$0x3]
    %v108 = vadd.f32 %v59, %v61
    %v109 = vadd.f32 %v60, %v62
    %v110 = vrot.slane %v108, 4
    %v111 = vadd.f32 %v108, %v110
    %v112 = vrot.slane %v111, 2
    %v113 = vadd.f32 %v111, %v112
    %v114 = vrot.slane %v113, 1
    %v115 = vadd.f32 %v113, %v114
    %v116 = vrot.slane %v109, 4
    %v117 = vadd.f32 %v109, %v116
    %v118 = vrot.slane %v117, 2
    %v119 = vadd.f32 %v117, %v118
    %v120 = vrot.slane %v119, 1
    %v121 = vadd.f32 %v119, %v120
    %v124 = vsel %vm102, %v121, %v115
    %v126 = vadd.f32 %v107, %v124
    %127 = vst [vmem:[#allocation8] sm:$0x3] %v126
    %v128 = vld [vmem:[#allocation10] sm:$0x3]
    %v129 = vrot.slane %v83, 4
    %v130 = vadd.f32 %v83, %v129
    %v131 = vrot.slane %v130, 2
    %v132 = vadd.f32 %v130, %v131
    %v133 = vrot.slane %v132, 1
    %v134 = vadd.f32 %v132, %v133
    %v135 = vrot.slane %v84, 4
    %v136 = vadd.f32 %v84, %v135
    %v137 = vrot.slane %v136, 2
    %v138 = vadd.f32 %v136, %v137
    %v139 = vrot.slane %v138, 1
    %v140 = vadd.f32 %v138, %v139
    %v143 = vsel %vm102, %v140, %v134
    %v145 = vadd.f32 %v128, %v143
    %146 = vst [vmem:[#allocation10] sm:$0x3] %v145
    // Predicated region
    $region22: #{tpu_custom_call.1} parent=1 // pred_check
      _
    $region23: #{tpu_custom_call.1} parent=1 // pred_check_branch
      %148 = sbr.rel (0) target = $region25
    $region24: #{tpu_custom_call.1} parent=1 // pred_region
      %s150 = ssub.s32 32, 32
      %151 = vsyncadd [#allocation4], %s150
      %s153 = sshll.u32 [#allocation7], 4
      %s154 = int_to_ptr.vmem [resolvable:$true] %s153
      %156 = dma.vmem_to_hbm [thread:$0]  %s154, 32, %s2, [#allocation4]
    $region25: #{tpu_custom_call.1} parent=1 // pred_fallthru
      _
    // Predicated region
    $region26: #{tpu_custom_call.1} parent=1 // pred_check
      _
    $region27: #{tpu_custom_call.1} parent=1 // pred_check_branch
      %158 = sbr.rel (0) target = $region29
    $region28: #{tpu_custom_call.1} parent=1 // pred_region
      %s160 = ssub.s32 32, 32
      %161 = vsyncadd [#allocation9], %s160
      %s163 = sshll.u32 [#allocation8], 4
      %s164 = int_to_ptr.vmem [resolvable:$true] %s163
      %166 = dma.vmem_to_hbm [thread:$0]  %s164, 32, %s3, [#allocation9]
    $region29: #{tpu_custom_call.1} parent=1 // pred_fallthru
      _
    // Predicated region
    $region30: #{tpu_custom_call.1} parent=1 // pred_check
      _
    $region31: #{tpu_custom_call.1} parent=1 // pred_check_branch
      %168 = sbr.rel (0) target = $region33
    $region32: #{tpu_custom_call.1} parent=1 // pred_region
      %s170 = ssub.s32 32, 32
      %171 = vsyncadd [#allocation9], %s170
      %s173 = sshll.u32 [#allocation10], 4
      %s174 = int_to_ptr.vmem [resolvable:$true] %s173
      %176 = dma.vmem_to_hbm [thread:$0]  %s174, 32, %s4, [#allocation9]
    $region33: #{tpu_custom_call.1} parent=1 // pred_fallthru
      _
    // Predicated region
    $region34: #{tpu_custom_call.1} parent=1 // pred_check
      _
    $region35: #{tpu_custom_call.1} parent=1 // pred_check_branch
      %178 = sbr.rel (0) target = $region37
    $region36: #{tpu_custom_call.1} parent=1 // pred_region
      %179 = dma.done [#allocation4], 32
    $region37: #{tpu_custom_call.1} parent=1 // pred_fallthru
      _
    // Predicated region
    $region38: #{tpu_custom_call.1} parent=1 // pred_check
      _
    $region39: #{tpu_custom_call.1} parent=1 // pred_check_branch
      %181 = sbr.rel (0) target = $region41
    $region40: #{tpu_custom_call.1} parent=1 // pred_region
      %182 = dma.done [#allocation9], 32
    $region41: #{tpu_custom_call.1} parent=1 // pred_fallthru
      _
    // Predicated region
    $region42: #{tpu_custom_call.1} parent=1 // pred_check
      _
    $region43: #{tpu_custom_call.1} parent=1 // pred_check_branch
      %184 = sbr.rel (0) target = $region45
    $region44: #{tpu_custom_call.1} parent=1 // pred_region
      %185 = dma.done [#allocation9], 32
    $region45: #{tpu_custom_call.1} parent=1 // pred_fallthru
      _
    %186 = vsyncpa [#allocation3], 1
    %187 = vsyncpa [#allocation6], 1
    %188 = vsyncpa [#allocation4], 1
    %189 = vsyncpa [#allocation9], 1

</llo_original>
